<compile_context>
chip_gen: v5e
topology: v5e:2x2
jax: 0.10.0
libtpu: 0.0.40
codegen_flags: <defaults>
</compile_context>

<pallas_src>
import jax
import jax.numpy as jnp
import numpy as np
from jax.experimental import pallas as pl
from jax.experimental.pallas import tpu as pltpu

# ---------------- model hyper-params (small, deterministic) ----------------
PARAMS = dict(
    DICT_SIZE=50,
    EMBED_DIM=16,
    TOKEN_SIZE=8,
    N_FILTER=4,
    FILTER_SIZE=3,
    STRIDE=1,
    PADDING=1,
    POOL_SIZE=2,
    N_HIDDEN_NODE=32,
)

DICT_SIZE   = PARAMS["DICT_SIZE"]
EMBED_DIM   = PARAMS["EMBED_DIM"]
TOKEN_SIZE  = PARAMS["TOKEN_SIZE"]
N_FILTER    = PARAMS["N_FILTER"]
FILTER_SIZE = PARAMS["FILTER_SIZE"]
STRIDE      = PARAMS["STRIDE"]
PADDING     = PARAMS["PADDING"]
POOL_SIZE   = PARAMS["POOL_SIZE"]
N_HIDDEN    = PARAMS["N_HIDDEN_NODE"]

L_OUT = (EMBED_DIM - FILTER_SIZE + 2 * PADDING) // STRIDE + 1                       # 16
NEW_DIM = int(((EMBED_DIM - FILTER_SIZE + 2 * PADDING) / STRIDE + 1) / POOL_SIZE)   # 8
CONV_COLS = POOL_SIZE * N_FILTER * NEW_DIM                                          # 64
FLAT_DIM = N_FILTER * NEW_DIM                                                       # 32
FCOUT = N_HIDDEN + 2                                                                # 34  [h | y]
DICT_PAD = 128                                                                      # lane-aligned dict
K_DIM = TOKEN_SIZE * DICT_PAD                                                       # 1024
OUT_W = 128                                                                         # lane-dense slab
TAR_OFF = 64                                                                        # pooled_tar lanes
MAX_B_TILE = 512


def _round_up(x, m):
    return ((x + m - 1) // m) * m


CONST_ROWS = _round_up(FLAT_DIM + 1, 8)                                             # 40

assert STRIDE == 1, "fused conv table assumes stride == 1"
assert L_OUT == NEW_DIM * POOL_SIZE
assert DICT_SIZE <= DICT_PAD
assert FCOUT <= TAR_OFF and TAR_OFF + FLAT_DIM <= OUT_W


# ------------------------------ Pallas kernel ------------------------------
def tcnn_kernel(tok_src_ref, tok_tar_ref, m_ref, const_ref, out_ref):
    """One batch tile per grid step.

    tok_src_ref, tok_tar_ref : (bt, TOKEN_SIZE) int32 token ids
    m_ref    : (K_DIM, CONV_COLS)  fused embed+pad+conv(+bias/T) table,
               row index = position*128 + dict_id
    const_ref: (CONST_ROWS, 128)   rows 0:32 = W_big (32,34), row 32 = b_big (34,)
    out_ref  : (bt, OUT_W) slab: [0:32]=h (=x_src_mmd), [32:34]=y_src,
               [64:96]=x_tar_mmd; lanes [34:64) & [96:128) left UNWRITTEN
               (the wrapper slices them away).
    """
    bt = tok_src_ref.shape[0]
    two_bt = 2 * bt

    # src and tar share embedding/conv: run them as one (2*bt)-row stream.
    tok = jnp.concatenate([tok_src_ref[...], tok_tar_ref[...]], axis=0)   # (2bt, 8)

    # One-hot over flattened (position, dict) -> K = 1024 lanes.  One compare
    # per position against a hoisted lane iota, lane-concatenated into a single
    # K-aligned operand for the MXU.
    d_iota = jax.lax.broadcasted_iota(jnp.int32, (two_bt, DICT_PAD), 1)
    oh = jnp.concatenate(
        [(tok[:, c:c + 1] == d_iota).astype(jnp.float32)
         for c in range(TOKEN_SIZE)],
        axis=1)                                                           # (2bt, 1024)

    # embedding lookup + zero-padding + Conv1d + conv bias in ONE matmul
    # (bias is pre-folded into every table row as bias/TOKEN_SIZE).
    conv = jnp.dot(oh, m_ref[...], preferred_element_type=jnp.float32)    # (2bt, 64)
    z = jnp.maximum(conv, 0.0)                                            # ReLU
    # MaxPool1d: columns ordered (pool_pos, filter, new_dim) -> one max of the
    # two contiguous 32-lane halves; result is already in PyTorch flatten order.
    pooled = jnp.maximum(z[:, :FLAT_DIM], z[:, FLAT_DIM:CONV_COLS])       # (2bt, 32)

    pooled_src = pooled[:bt]                                              # (bt, 32)
    pooled_tar = pooled[bt:]                                              # (bt, 32)

    # fc and out folded: [h | y] = pooled_src @ W_big + b_big,
    # W_big = [Wfc^T | Wfc^T Wout^T], b_big = [bfc | bfc Wout^T + bout].
    w_big = const_ref[0:FLAT_DIM, 0:FCOUT]                                # (32, 34)
    b_big = const_ref[FLAT_DIM:FLAT_DIM + 1, 0:FCOUT]                     # (1, 34)
    hy = jnp.dot(pooled_src, w_big,
                 preferred_element_type=jnp.float32) + b_big              # (bt, 34)

    # Two stores into the lane-dense output slab.
    out_ref[:, 0:FCOUT] = hy
    out_ref[:, TAR_OFF:TAR_OFF + FLAT_DIM] = pooled_tar


# ------------------------------- wrapper -----------------------------------
def tcnn_forward(x_src_tok, x_tar_tok, params):
    B = x_src_tok.shape[0]

    # Batch tile: multiple of 8, capped at 512 (fits under v5e's 16 MiB scoped
    # VMEM).  For B > 8 aim for >=2 tiles so v7x's second TensorCore gets work.
    if B <= 8:
        bt = 8
    else:
        bt = min(MAX_B_TILE, _round_up(pl.cdiv(B, 2), 8))
    n_tiles = pl.cdiv(B, bt)
    b_pad = n_tiles * bt

    tok_src = jnp.pad(x_src_tok.astype(jnp.int32), ((0, b_pad - B), (0, 0)))
    tok_tar = jnp.pad(x_tar_tok.astype(jnp.int32), ((0, b_pad - B), (0, 0)))

    # ---- fuse embedding + zero-padding + conv (+ bias) into one table ----
    # out[b, f, l] = sum_c sum_k w[f,c,k] * emb_pad[tok[b,c], l+k] + bias[f]
    #             = sum_c M[c*128 + tok[b,c], j],  j = p*32 + f*8 + m,  l = 2m + p
    emb_pad = jnp.pad(params["embedding"], ((0, 0), (PADDING, PADDING)))       # (50, 18)
    win = jnp.stack([emb_pad[:, l:l + FILTER_SIZE] for l in range(L_OUT)],
                    axis=1)                                                    # (50, 16, 3)
    m_tbl = jnp.einsum("fck,dlk->cdfl", params["conv_w"], win,
                       precision=jax.lax.Precision.HIGHEST)                    # (8, 50, 4, 16)
    m_tbl = m_tbl.reshape(TOKEN_SIZE, DICT_SIZE, N_FILTER, NEW_DIM, POOL_SIZE)
    m_tbl = jnp.transpose(m_tbl, (0, 1, 4, 2, 3)).reshape(
        TOKEN_SIZE, DICT_SIZE, CONV_COLS)                                      # (8, 50, 64)
    # Fold conv bias: each position's one-hot block selects exactly one row, so
    # adding bias/TOKEN_SIZE to every real row sums back to the full bias.
    b_cols = jnp.broadcast_to(params["conv_b"][None, :, None],
                              (POOL_SIZE, N_FILTER, NEW_DIM)).reshape(1, 1, CONV_COLS)
    m_tbl = m_tbl + b_cols / TOKEN_SIZE
    # Pad dict 50 -> 128 (zero rows, never selected) and flatten (pos, dict) -> K.
    m_tbl = jnp.pad(m_tbl, ((0, 0), (0, DICT_PAD - DICT_SIZE), (0, 0)))
    m_tbl = m_tbl.reshape(K_DIM, CONV_COLS)                                    # (1024, 64)

    # ---- fold fc + out (no nonlinearity in between) into one matmul ----
    w_fc_t = params["fc_w"].T                                                  # (32, 32)
    w_out_t = params["out_w"].T                                                # (32, 2)
    w_big = jnp.concatenate([w_fc_t, w_fc_t @ w_out_t], axis=1)                # (32, 34)
    b_big = jnp.concatenate([params["fc_b"],
                             params["fc_b"] @ w_out_t + params["out_b"]])      # (34,)

    const = jnp.zeros((CONST_ROWS, 128), jnp.float32)
    const = const.at[0:FLAT_DIM, 0:FCOUT].set(w_big)
    const = const.at[FLAT_DIM, 0:FCOUT].set(b_big)

    slab = pl.pallas_call(
        tcnn_kernel,
        out_shape=jax.ShapeDtypeStruct((b_pad, OUT_W), jnp.float32),
        grid=(n_tiles,),
        in_specs=[
            pl.BlockSpec((bt, TOKEN_SIZE), lambda b: (b, 0)),
            pl.BlockSpec((bt, TOKEN_SIZE), lambda b: (b, 0)),
            pl.BlockSpec((K_DIM, CONV_COLS), lambda b: (0, 0)),      # resident table
            pl.BlockSpec((CONST_ROWS, 128), lambda b: (0, 0)),       # resident consts
        ],
        out_specs=pl.BlockSpec((bt, OUT_W), lambda b: (b, 0)),
        compiler_params=pltpu.CompilerParams(
            dimension_semantics=("parallel",)),      # batch tiles are independent
    )(tok_src, tok_tar, m_tbl, const)

    slab = slab[:B]
    x_src_mmd = slab[:, 0:N_HIDDEN]                                            # (B, 32)
    y_src = slab[:, N_HIDDEN:FCOUT]                                            # (B, 2)
    x_tar_mmd = slab[:, TAR_OFF:TAR_OFF + FLAT_DIM]                            # (B, 32)
    return y_src, x_src_mmd, x_tar_mmd


# --------------------------- pure-JAX reference -----------------------------
def tcnn_reference(x_src_tok, x_tar_tok, params):
    emb = params["embedding"]

    def branch(tok):
        x = jnp.take(emb, tok, axis=0)                            # (B, T, E) = NCL
        c = jax.lax.conv_general_dilated(
            x, params["conv_w"], window_strides=(STRIDE,),
            padding=[(PADDING, PADDING)],
            dimension_numbers=("NCH", "OIH", "NCH"))
        c = c + params["conv_b"][None, :, None]
        z = jnp.maximum(c, 0.0)
        pooled = z.reshape(z.shape[0], N_FILTER, NEW_DIM, POOL_SIZE).max(axis=-1)
        return pooled.reshape(z.shape[0], -1)

    src_flat = branch(x_src_tok)
    tar_flat = branch(x_tar_tok)
    h = src_flat @ params["fc_w"].T + params["fc_b"]
    y = h @ params["out_w"].T + params["out_b"]
    return y, h, tar_flat


# ---------------------------------- main ------------------------------------
if __name__ == "__main__":
    key = jax.random.PRNGKey(0)
    keys = jax.random.split(key, 11)

    params = dict(
        embedding=jax.random.normal(keys[0], (DICT_SIZE, EMBED_DIM), jnp.float32) * 0.5,
        conv_w=jax.random.normal(keys[1], (N_FILTER, TOKEN_SIZE, FILTER_SIZE), jnp.float32) * 0.2,
        conv_b=jax.random.normal(keys[2], (N_FILTER,), jnp.float32) * 0.1,
        fc_w=jax.random.normal(keys[3], (N_HIDDEN, N_FILTER * NEW_DIM), jnp.float32) * 0.1,
        fc_b=jax.random.normal(keys[4], (N_HIDDEN,), jnp.float32) * 0.1,
        out_w=jax.random.normal(keys[5], (2, N_HIDDEN), jnp.float32) * 0.1,
        out_b=jax.random.normal(keys[6], (2,), jnp.float32) * 0.1,
    )

    # --- small batch (single tile) ---
    B = 2
    x_src = jax.random.randint(keys[7], (B, TOKEN_SIZE), 0, DICT_SIZE, dtype=jnp.int32)
    x_tar = jax.random.randint(keys[8], (B, TOKEN_SIZE), 0, DICT_SIZE, dtype=jnp.int32)

    y_src, x_src_mmd, x_tar_mmd = tcnn_forward(x_src, x_tar, params)
    jax.block_until_ready((y_src, x_src_mmd, x_tar_mmd))

    y_ref, h_ref, tar_ref = tcnn_reference(x_src, x_tar, params)
    np.testing.assert_allclose(np.asarray(y_src), np.asarray(y_ref), rtol=1e-4, atol=1e-4)
    np.testing.assert_allclose(np.asarray(x_src_mmd), np.asarray(h_ref), rtol=1e-4, atol=1e-4)
    np.testing.assert_allclose(np.asarray(x_tar_mmd), np.asarray(tar_ref), rtol=1e-4, atol=1e-4)

    # --- non-divisible batch (exercises the >=2-tile path + row padding) ---
    B2 = 13
    x_src2 = jax.random.randint(keys[9], (B2, TOKEN_SIZE), 0, DICT_SIZE, dtype=jnp.int32)
    x_tar2 = jax.random.randint(keys[10], (B2, TOKEN_SIZE), 0, DICT_SIZE, dtype=jnp.int32)
    y2, s2, t2 = tcnn_forward(x_src2, x_tar2, params)
    jax.block_until_ready((y2, s2, t2))
    y2_r, s2_r, t2_r = tcnn_reference(x_src2, x_tar2, params)
    np.testing.assert_allclose(np.asarray(y2), np.asarray(y2_r), rtol=1e-4, atol=1e-4)
    np.testing.assert_allclose(np.asarray(s2), np.asarray(s2_r), rtol=1e-4, atol=1e-4)
    np.testing.assert_allclose(np.asarray(t2), np.asarray(t2_r), rtol=1e-4, atol=1e-4)

    print("KERNEL_OK")
</pallas_src>

<mosaic_0001>
module attributes {stable_mosaic.version = 11 : i64} {
  func.func @tcnn_kernel(%arg0: i32, %arg1: memref<8x8xi32, #tpu.memory_space<vmem>>, %arg2: memref<8x8xi32, #tpu.memory_space<vmem>>, %arg3: memref<1024x64xf32, #tpu.memory_space<vmem>>, %arg4: memref<40x128xf32, #tpu.memory_space<vmem>>, %arg5: memref<8x128xf32, #tpu.memory_space<vmem>>) attributes {dimension_semantics = [#tpu.dimension_semantics<parallel>], iteration_bounds = array<i64: 1>, scalar_prefetch = 0 : i64, scratch_operands = 0 : i64, tpu.core_type = #tpu.core_type<tc>, window_params = [{transform_indices = @transform_0, window_bounds = array<i64: 8, 8>}, {transform_indices = @transform_1, window_bounds = array<i64: 8, 8>}, {pipeline_mode = #tpu.pipeline_mode<synchronous>, transform_indices = @transform_2, window_bounds = array<i64: 1024, 64>}, {pipeline_mode = #tpu.pipeline_mode<synchronous>, transform_indices = @transform_3, window_bounds = array<i64: 40, 128>}, {transform_indices = @transform_4, window_bounds = array<i64: 8, 128>}]} {
    %c0 = arith.constant 0 : index
    %c0_0 = arith.constant 0 : index
    %0 = vector.load %arg1[%c0, %c0_0] : memref<8x8xi32, #tpu.memory_space<vmem>>, vector<8x8xi32>
    %c0_1 = arith.constant 0 : index
    %c0_2 = arith.constant 0 : index
    %1 = vector.load %arg2[%c0_1, %c0_2] : memref<8x8xi32, #tpu.memory_space<vmem>>, vector<8x8xi32>
    %2 = tpu.concatenate %0, %1 in 0 : vector<8x8xi32>, vector<8x8xi32> -> vector<16x8xi32>
    %3 = tpu.iota {dimensions = array<i32: 1>} : vector<16x128xi32>
    %4 = vector.extract_strided_slice %2 {offsets = [0, 0], sizes = [16, 1], strides = [1, 1]} : vector<16x8xi32> to vector<16x1xi32>
    %5 = vector.broadcast %4 : vector<16x1xi32> to vector<16x128xi32>
    %6 = arith.cmpi eq, %5, %3 : vector<16x128xi32>
    %7 = arith.extui %6 : vector<16x128xi1> to vector<16x128xi32>
    %8 = arith.sitofp %7 : vector<16x128xi32> to vector<16x128xf32>
    %9 = vector.extract_strided_slice %2 {offsets = [0, 1], sizes = [16, 1], strides = [1, 1]} : vector<16x8xi32> to vector<16x1xi32>
    %10 = vector.broadcast %9 : vector<16x1xi32> to vector<16x128xi32>
    %11 = arith.cmpi eq, %10, %3 : vector<16x128xi32>
    %12 = arith.extui %11 : vector<16x128xi1> to vector<16x128xi32>
    %13 = arith.sitofp %12 : vector<16x128xi32> to vector<16x128xf32>
    %14 = vector.extract_strided_slice %2 {offsets = [0, 2], sizes = [16, 1], strides = [1, 1]} : vector<16x8xi32> to vector<16x1xi32>
    %15 = vector.broadcast %14 : vector<16x1xi32> to vector<16x128xi32>
    %16 = arith.cmpi eq, %15, %3 : vector<16x128xi32>
    %17 = arith.extui %16 : vector<16x128xi1> to vector<16x128xi32>
    %18 = arith.sitofp %17 : vector<16x128xi32> to vector<16x128xf32>
    %19 = vector.extract_strided_slice %2 {offsets = [0, 3], sizes = [16, 1], strides = [1, 1]} : vector<16x8xi32> to vector<16x1xi32>
    %20 = vector.broadcast %19 : vector<16x1xi32> to vector<16x128xi32>
    %21 = arith.cmpi eq, %20, %3 : vector<16x128xi32>
    %22 = arith.extui %21 : vector<16x128xi1> to vector<16x128xi32>
    %23 = arith.sitofp %22 : vector<16x128xi32> to vector<16x128xf32>
    %24 = vector.extract_strided_slice %2 {offsets = [0, 4], sizes = [16, 1], strides = [1, 1]} : vector<16x8xi32> to vector<16x1xi32>
    %25 = vector.broadcast %24 : vector<16x1xi32> to vector<16x128xi32>
    %26 = arith.cmpi eq, %25, %3 : vector<16x128xi32>
    %27 = arith.extui %26 : vector<16x128xi1> to vector<16x128xi32>
    %28 = arith.sitofp %27 : vector<16x128xi32> to vector<16x128xf32>
    %29 = vector.extract_strided_slice %2 {offsets = [0, 5], sizes = [16, 1], strides = [1, 1]} : vector<16x8xi32> to vector<16x1xi32>
    %30 = vector.broadcast %29 : vector<16x1xi32> to vector<16x128xi32>
    %31 = arith.cmpi eq, %30, %3 : vector<16x128xi32>
    %32 = arith.extui %31 : vector<16x128xi1> to vector<16x128xi32>
    %33 = arith.sitofp %32 : vector<16x128xi32> to vector<16x128xf32>
    %34 = vector.extract_strided_slice %2 {offsets = [0, 6], sizes = [16, 1], strides = [1, 1]} : vector<16x8xi32> to vector<16x1xi32>
    %35 = vector.broadcast %34 : vector<16x1xi32> to vector<16x128xi32>
    %36 = arith.cmpi eq, %35, %3 : vector<16x128xi32>
    %37 = arith.extui %36 : vector<16x128xi1> to vector<16x128xi32>
    %38 = arith.sitofp %37 : vector<16x128xi32> to vector<16x128xf32>
    %39 = vector.extract_strided_slice %2 {offsets = [0, 7], sizes = [16, 1], strides = [1, 1]} : vector<16x8xi32> to vector<16x1xi32>
    %40 = vector.broadcast %39 : vector<16x1xi32> to vector<16x128xi32>
    %41 = arith.cmpi eq, %40, %3 : vector<16x128xi32>
    %42 = arith.extui %41 : vector<16x128xi1> to vector<16x128xi32>
    %43 = arith.sitofp %42 : vector<16x128xi32> to vector<16x128xf32>
    %44 = tpu.concatenate %8, %13, %18, %23, %28, %33, %38, %43 in 1 : vector<16x128xf32>, vector<16x128xf32>, vector<16x128xf32>, vector<16x128xf32>, vector<16x128xf32>, vector<16x128xf32>, vector<16x128xf32>, vector<16x128xf32> -> vector<16x1024xf32>
    %c0_3 = arith.constant 0 : index
    %c0_4 = arith.constant 0 : index
    %45 = vector.load %arg3[%c0_3, %c0_4] : memref<1024x64xf32, #tpu.memory_space<vmem>>, vector<1024x64xf32>
    %cst = arith.constant dense<0.000000e+00> : vector<16x64xf32>
    %46 = tpu.matmul %44, %45, %cst {dimension_numbers = #tpu.dot_dimension_numbers<[1], [0], [0], [1], [0, 0, 1, 1], [], []>} : vector<16x1024xf32>, vector<1024x64xf32>, vector<16x64xf32> -> vector<16x64xf32>
    %cst_5 = arith.constant 0.000000e+00 : f32
    %47 = vector.broadcast %cst_5 : f32 to vector<16x64xf32>
    %48 = arith.maximumf %46, %47 : vector<16x64xf32>
    %49 = vector.extract_strided_slice %48 {offsets = [0, 0], sizes = [16, 32], strides = [1, 1]} : vector<16x64xf32> to vector<16x32xf32>
    %50 = vector.extract_strided_slice %48 {offsets = [0, 32], sizes = [16, 32], strides = [1, 1]} : vector<16x64xf32> to vector<16x32xf32>
    %51 = arith.maximumf %49, %50 : vector<16x32xf32>
    %52 = vector.extract_strided_slice %51 {offsets = [0, 0], sizes = [8, 32], strides = [1, 1]} : vector<16x32xf32> to vector<8x32xf32>
    %53 = vector.extract_strided_slice %51 {offsets = [8, 0], sizes = [8, 32], strides = [1, 1]} : vector<16x32xf32> to vector<8x32xf32>
    %c0_6 = arith.constant 0 : index
    %c0_7 = arith.constant 0 : index
    %54 = vector.load %arg4[%c0_6, %c0_7] : memref<40x128xf32, #tpu.memory_space<vmem>>, vector<32x34xf32>
    %c32 = arith.constant 32 : index
    %c0_8 = arith.constant 0 : index
    %55 = vector.load %arg4[%c32, %c0_8] : memref<40x128xf32, #tpu.memory_space<vmem>>, vector<1x34xf32>
    %cst_9 = arith.constant dense<0.000000e+00> : vector<8x34xf32>
    %56 = tpu.matmul %52, %54, %cst_9 {dimension_numbers = #tpu.dot_dimension_numbers<[1], [0], [0], [1], [0, 0, 1, 1], [], []>} : vector<8x32xf32>, vector<32x34xf32>, vector<8x34xf32> -> vector<8x34xf32>
    %57 = vector.broadcast %55 : vector<1x34xf32> to vector<8x34xf32>
    %58 = arith.addf %56, %57 : vector<8x34xf32>
    %c0_10 = arith.constant 0 : index
    %c0_11 = arith.constant 0 : index
    %59 = vector.load %arg5[%c0_10, %c0_11] : memref<8x128xf32, #tpu.memory_space<vmem>>, vector<8x34xf32>
    tpu.vector_store %arg5[%c0_10, %c0_11], %58 {strides = array<i32>} : memref<8x128xf32, #tpu.memory_space<vmem>>, vector<8x34xf32>,
    %c0_12 = arith.constant 0 : index
    %c64 = arith.constant 64 : index
    %60 = vector.load %arg5[%c0_12, %c64] : memref<8x128xf32, #tpu.memory_space<vmem>>, vector<8x32xf32>
    tpu.vector_store %arg5[%c0_12, %c64], %53 {strides = array<i32>} : memref<8x128xf32, #tpu.memory_space<vmem>>, vector<8x32xf32>,
    return
  }
  func.func @transform_0(%arg0: i32) -> (i32, i32) {
    %c0_i32 = arith.constant 0 : i32
    %c0_i32_0 = arith.constant 0 : i32
    return %arg0, %c0_i32 : i32, i32
  }
  func.func @transform_1(%arg0: i32) -> (i32, i32) {
    %c0_i32 = arith.constant 0 : i32
    %c0_i32_0 = arith.constant 0 : i32
    return %arg0, %c0_i32 : i32, i32
  }
  func.func @transform_2(%arg0: i32) -> (i32, i32) {
    %c0_i32 = arith.constant 0 : i32
    %c0_i32_0 = arith.constant 0 : i32
    %c0_i32_1 = arith.constant 0 : i32
    return %c0_i32, %c0_i32_0 : i32, i32
  }
  func.func @transform_3(%arg0: i32) -> (i32, i32) {
    %c0_i32 = arith.constant 0 : i32
    %c0_i32_0 = arith.constant 0 : i32
    %c0_i32_1 = arith.constant 0 : i32
    return %c0_i32, %c0_i32_0 : i32, i32
  }
  func.func @transform_4(%arg0: i32) -> (i32, i32) {
    %c0_i32 = arith.constant 0 : i32
    %c0_i32_0 = arith.constant 0 : i32
    return %arg0, %c0_i32 : i32, i32
  }
}

</mosaic_0001>

<llo_original>
// kernel: tpu_custom_call.1
$region0: #{tpu_custom_call.1}
  #allocation0 [shape = 'u32[]', space=smem, size = 0x4, offset = 0x4, fixed_abs, tag = 'smem constant byte address 0x4 - core index']
  #allocation1 [shape = 'u32[72,128]{1,0:T(1,128)}', space=vmem, size = 0x9000, scoped, tag = 'internal scratch']
  %s0 = inlined_call_operand.vmem [shape: s32[8,8], index: 0, kind: input, shape index: {}]
  %s1 = inlined_call_operand.vmem [shape: s32[8,8], index: 1, kind: input, shape index: {}]
  %s2 = inlined_call_operand.vmem [shape: f32[1024,64], index: 2, kind: input, shape index: {}]
  %s3 = inlined_call_operand.vmem [shape: f32[40,128], index: 3, kind: input, shape index: {}]
  %s4 = inlined_call_operand.hbm [shape: f32[8,128], index: 4, kind: output, shape index: {}]
  %s5 = sld [smem:[#allocation0]]
  $region26: #{tpu_custom_call.1} parent=0
    _
  %s7 = ssub.s32 1, %s5
  %s8 = scalar_select 0, %s7, %s5
  $region1: #{tpu_custom_call.1} parent=0
    #allocation2 [shape = 'u8[4096]{0}', space=vmem, size = 0x1000, scoped, tag = 'output window, operand 0, single buffered']
    #allocation3 [shape = 's32[1]{0}', space=sflag, size = 0x4, scoped, tag = 'scoped memory for tpu_custom_call.1']
    %9 = vsyncpa [#allocation3], 0
    // Predicated region
    $region2: #{tpu_custom_call.1} parent=1 // pred_check
      _
    $region3: #{tpu_custom_call.1} parent=1 // pred_check_branch
      %11 = sbr.rel (0) target = $region5
    $region4: #{tpu_custom_call.1} parent=1 // pred_region
      _
    $region5: #{tpu_custom_call.1} parent=1 // pred_fallthru
      _
    // Predicated region
    $region6: #{tpu_custom_call.1} parent=1 // pred_check
      _
    $region7: #{tpu_custom_call.1} parent=1 // pred_check_branch
      %13 = sbr.rel (0) target = $region9
    $region8: #{tpu_custom_call.1} parent=1 // pred_region
      _
    $region9: #{tpu_custom_call.1} parent=1 // pred_fallthru
      _
    // Predicated region
    $region10: #{tpu_custom_call.1} parent=1 // pred_check
      _
    $region11: #{tpu_custom_call.1} parent=1 // pred_check_branch
      %15 = sbr.rel (0) target = $region13
    $region12: #{tpu_custom_call.1} parent=1 // pred_region
      _
    $region13: #{tpu_custom_call.1} parent=1 // pred_fallthru
      _
    // Predicated region
    $region14: #{tpu_custom_call.1} parent=1 // pred_check
      _
    $region15: #{tpu_custom_call.1} parent=1 // pred_check_branch
      %17 = sbr.rel (0) target = $region17
    $region16: #{tpu_custom_call.1} parent=1 // pred_region
      _
    $region17: #{tpu_custom_call.1} parent=1 // pred_fallthru
      _
    %v18 = vld [vmem:[%s0] sm:$0xff]
    %v19 = vld [vmem:[%s1] sm:$0xff]
    %v20 = vlaneseq
    %v21 = vand.u32 %v20, 127
    %22 = vset.pattern.permute.xlu0 0
    %23 = vperm.xlu0 %22, %v18
    %v24 = vpop.permute.xlu0 %23
    %25 = vset.pattern.permute.xlu0 0
    %26 = vperm.xlu0 %25, %v19
    %v27 = vpop.permute.xlu0 %26
    %vm28 = vcmp.eq.s32.totalorder %v24, %v21
    %vm29 = vcmp.eq.s32.totalorder %v27, %v21
    %v30 = vsel %vm28, 1, 0
    %v31 = vsel %vm29, 1, 0
    %v32 = vcvt.s32.f32 %v30
    %v33 = vcvt.s32.f32 %v31
    %34 = vset.pattern.permute.xlu0 1
    %35 = vperm.xlu0 %34, %v18
    %v36 = vpop.permute.xlu0 %35
    %37 = vset.pattern.permute.xlu0 1
    %38 = vperm.xlu0 %37, %v19
    %v39 = vpop.permute.xlu0 %38
    %vm40 = vcmp.eq.s32.totalorder %v36, %v21
    %vm41 = vcmp.eq.s32.totalorder %v39, %v21
    %v42 = vsel %vm40, 1, 0
    %v43 = vsel %vm41, 1, 0
    %v44 = vcvt.s32.f32 %v42
    %v45 = vcvt.s32.f32 %v43
    %46 = vset.pattern.permute.xlu0 2
    %47 = vperm.xlu0 %46, %v18
    %v48 = vpop.permute.xlu0 %47
    %49 = vset.pattern.permute.xlu0 2
    %50 = vperm.xlu0 %49, %v19
    %v51 = vpop.permute.xlu0 %50
    %vm52 = vcmp.eq.s32.totalorder %v48, %v21
    %vm53 = vcmp.eq.s32.totalorder %v51, %v21
    %v54 = vsel %vm52, 1, 0
    %v55 = vsel %vm53, 1, 0
    %v56 = vcvt.s32.f32 %v54
    %v57 = vcvt.s32.f32 %v55
    %58 = vset.pattern.permute.xlu0 3
    %59 = vperm.xlu0 %58, %v18
    %v60 = vpop.permute.xlu0 %59
    %61 = vset.pattern.permute.xlu0 3
    %62 = vperm.xlu0 %61, %v19
    %v63 = vpop.permute.xlu0 %62
    %vm64 = vcmp.eq.s32.totalorder %v60, %v21
    %vm65 = vcmp.eq.s32.totalorder %v63, %v21
    %v66 = vsel %vm64, 1, 0
    %v67 = vsel %vm65, 1, 0
    %v68 = vcvt.s32.f32 %v66
    %v69 = vcvt.s32.f32 %v67
    %70 = vset.pattern.permute.xlu0 4
    %71 = vperm.xlu0 %70, %v18
    %v72 = vpop.permute.xlu0 %71
    %73 = vset.pattern.permute.xlu0 4
    %74 = vperm.xlu0 %73, %v19
    %v75 = vpop.permute.xlu0 %74
    %vm76 = vcmp.eq.s32.totalorder %v72, %v21
    %vm77 = vcmp.eq.s32.totalorder %v75, %v21
    %v78 = vsel %vm76, 1, 0
    %v79 = vsel %vm77, 1, 0
    %v80 = vcvt.s32.f32 %v78
    %v81 = vcvt.s32.f32 %v79
    %82 = vset.pattern.permute.xlu0 5
    %83 = vperm.xlu0 %82, %v18
    %v84 = vpop.permute.xlu0 %83
    %85 = vset.pattern.permute.xlu0 5
    %86 = vperm.xlu0 %85, %v19
    %v87 = vpop.permute.xlu0 %86
    %vm88 = vcmp.eq.s32.totalorder %v84, %v21
    %vm89 = vcmp.eq.s32.totalorder %v87, %v21
    %v90 = vsel %vm88, 1, 0
    %v91 = vsel %vm89, 1, 0
    %v92 = vcvt.s32.f32 %v90
    %v93 = vcvt.s32.f32 %v91
    %94 = vset.pattern.permute.xlu0 6
    %95 = vperm.xlu0 %94, %v18
    %v96 = vpop.permute.xlu0 %95
    %97 = vset.pattern.permute.xlu0 6
    %98 = vperm.xlu0 %97, %v19
    %v99 = vpop.permute.xlu0 %98
    %vm100 = vcmp.eq.s32.totalorder %v96, %v21
    %vm101 = vcmp.eq.s32.totalorder %v99, %v21
    %v102 = vsel %vm100, 1, 0
    %v103 = vsel %vm101, 1, 0
    %v104 = vcvt.s32.f32 %v102
    %v105 = vcvt.s32.f32 %v103
    %106 = vset.pattern.permute.xlu0 7
    %107 = vperm.xlu0 %106, %v18
    %v108 = vpop.permute.xlu0 %107
    %109 = vset.pattern.permute.xlu0 7
    %110 = vperm.xlu0 %109, %v19
    %v111 = vpop.permute.xlu0 %110
    %vm112 = vcmp.eq.s32.totalorder %v108, %v21
    %vm113 = vcmp.eq.s32.totalorder %v111, %v21
    %v114 = vsel %vm112, 1, 0
    %v115 = vsel %vm113, 1, 0
    %v116 = vcvt.s32.f32 %v114
    %v117 = vcvt.s32.f32 %v115
    %v118 = vld [vmem:[%s2] sm:$0xff]
    %v119 = vld [vmem:[%s2 + $0x8] sm:$0xff]
    %v120 = vld [vmem:[%s2 + $0x10] sm:$0xff]
    %v121 = vld [vmem:[%s2 + $0x18] sm:$0xff]
    %v122 = vld [vmem:[%s2 + $0x20] sm:$0xff]
    %v123 = vld [vmem:[%s2 + $0x28] sm:$0xff]
    %v124 = vld [vmem:[%s2 + $0x30] sm:$0xff]
    %v125 = vld [vmem:[%s2 + $0x38] sm:$0xff]
    %v126 = vld [vmem:[%s2 + $0x40] sm:$0xff]
    %v127 = vld [vmem:[%s2 + $0x48] sm:$0xff]
    %v128 = vld [vmem:[%s2 + $0x50] sm:$0xff]
    %v129 = vld [vmem:[%s2 + $0x58] sm:$0xff]
    %v130 = vld [vmem:[%s2 + $0x60] sm:$0xff]
    %v131 = vld [vmem:[%s2 + $0x68] sm:$0xff]
    %v132 = vld [vmem:[%s2 + $0x70] sm:$0xff]
    %v133 = vld [vmem:[%s2 + $0x78] sm:$0xff]
    %v134 = vld [vmem:[%s2 + $0x80] sm:$0xff]
    %v135 = vld [vmem:[%s2 + $0x88] sm:$0xff]
    %v136 = vld [vmem:[%s2 + $0x90] sm:$0xff]
    %v137 = vld [vmem:[%s2 + $0x98] sm:$0xff]
    %v138 = vld [vmem:[%s2 + $0xa0] sm:$0xff]
    %v139 = vld [vmem:[%s2 + $0xa8] sm:$0xff]
    %v140 = vld [vmem:[%s2 + $0xb0] sm:$0xff]
    %v141 = vld [vmem:[%s2 + $0xb8] sm:$0xff]
    %v142 = vld [vmem:[%s2 + $0xc0] sm:$0xff]
    %v143 = vld [vmem:[%s2 + $0xc8] sm:$0xff]
    %v144 = vld [vmem:[%s2 + $0xd0] sm:$0xff]
    %v145 = vld [vmem:[%s2 + $0xd8] sm:$0xff]
    %v146 = vld [vmem:[%s2 + $0xe0] sm:$0xff]
    %v147 = vld [vmem:[%s2 + $0xe8] sm:$0xff]
    %v148 = vld [vmem:[%s2 + $0xf0] sm:$0xff]
    %v149 = vld [vmem:[%s2 + $0xf8] sm:$0xff]
    %v150 = vld [vmem:[%s2 + $0x100] sm:$0xff]
    %v151 = vld [vmem:[%s2 + $0x108] sm:$0xff]
    %v152 = vld [vmem:[%s2 + $0x110] sm:$0xff]
    %v153 = vld [vmem:[%s2 + $0x118] sm:$0xff]
    %v154 = vld [vmem:[%s2 + $0x120] sm:$0xff]
    %v155 = vld [vmem:[%s2 + $0x128] sm:$0xff]
    %v156 = vld [vmem:[%s2 + $0x130] sm:$0xff]
    %v157 = vld [vmem:[%s2 + $0x138] sm:$0xff]
    %v158 = vld [vmem:[%s2 + $0x140] sm:$0xff]
    %v159 = vld [vmem:[%s2 + $0x148] sm:$0xff]
    %v160 = vld [vmem:[%s2 + $0x150] sm:$0xff]
    %v161 = vld [vmem:[%s2 + $0x158] sm:$0xff]
    %v162 = vld [vmem:[%s2 + $0x160] sm:$0xff]
    %v163 = vld [vmem:[%s2 + $0x168] sm:$0xff]
    %v164 = vld [vmem:[%s2 + $0x170] sm:$0xff]
    %v165 = vld [vmem:[%s2 + $0x178] sm:$0xff]
    %v166 = vld [vmem:[%s2 + $0x180] sm:$0xff]
    %v167 = vld [vmem:[%s2 + $0x188] sm:$0xff]
    %v168 = vld [vmem:[%s2 + $0x190] sm:$0xff]
    %v169 = vld [vmem:[%s2 + $0x198] sm:$0xff]
    %v170 = vld [vmem:[%s2 + $0x1a0] sm:$0xff]
    %v171 = vld [vmem:[%s2 + $0x1a8] sm:$0xff]
    %v172 = vld [vmem:[%s2 + $0x1b0] sm:$0xff]
    %v173 = vld [vmem:[%s2 + $0x1b8] sm:$0xff]
    %v174 = vld [vmem:[%s2 + $0x1c0] sm:$0xff]
    %v175 = vld [vmem:[%s2 + $0x1c8] sm:$0xff]
    %v176 = vld [vmem:[%s2 + $0x1d0] sm:$0xff]
    %v177 = vld [vmem:[%s2 + $0x1d8] sm:$0xff]
    %v178 = vld [vmem:[%s2 + $0x1e0] sm:$0xff]
    %v179 = vld [vmem:[%s2 + $0x1e8] sm:$0xff]
    %v180 = vld [vmem:[%s2 + $0x1f0] sm:$0xff]
    %v181 = vld [vmem:[%s2 + $0x1f8] sm:$0xff]
    %v182 = vld [vmem:[%s2 + $0x200] sm:$0xff]
    %v183 = vld [vmem:[%s2 + $0x208] sm:$0xff]
    %v184 = vld [vmem:[%s2 + $0x210] sm:$0xff]
    %v185 = vld [vmem:[%s2 + $0x218] sm:$0xff]
    %v186 = vld [vmem:[%s2 + $0x220] sm:$0xff]
    %v187 = vld [vmem:[%s2 + $0x228] sm:$0xff]
    %v188 = vld [vmem:[%s2 + $0x230] sm:$0xff]
    %v189 = vld [vmem:[%s2 + $0x238] sm:$0xff]
    %v190 = vld [vmem:[%s2 + $0x240] sm:$0xff]
    %v191 = vld [vmem:[%s2 + $0x248] sm:$0xff]
    %v192 = vld [vmem:[%s2 + $0x250] sm:$0xff]
    %v193 = vld [vmem:[%s2 + $0x258] sm:$0xff]
    %v194 = vld [vmem:[%s2 + $0x260] sm:$0xff]
    %v195 = vld [vmem:[%s2 + $0x268] sm:$0xff]
    %v196 = vld [vmem:[%s2 + $0x270] sm:$0xff]
    %v197 = vld [vmem:[%s2 + $0x278] sm:$0xff]
    %v198 = vld [vmem:[%s2 + $0x280] sm:$0xff]
    %v199 = vld [vmem:[%s2 + $0x288] sm:$0xff]
    %v200 = vld [vmem:[%s2 + $0x290] sm:$0xff]
    %v201 = vld [vmem:[%s2 + $0x298] sm:$0xff]
    %v202 = vld [vmem:[%s2 + $0x2a0] sm:$0xff]
    %v203 = vld [vmem:[%s2 + $0x2a8] sm:$0xff]
    %v204 = vld [vmem:[%s2 + $0x2b0] sm:$0xff]
    %v205 = vld [vmem:[%s2 + $0x2b8] sm:$0xff]
    %v206 = vld [vmem:[%s2 + $0x2c0] sm:$0xff]
    %v207 = vld [vmem:[%s2 + $0x2c8] sm:$0xff]
    %v208 = vld [vmem:[%s2 + $0x2d0] sm:$0xff]
    %v209 = vld [vmem:[%s2 + $0x2d8] sm:$0xff]
    %v210 = vld [vmem:[%s2 + $0x2e0] sm:$0xff]
    %v211 = vld [vmem:[%s2 + $0x2e8] sm:$0xff]
    %v212 = vld [vmem:[%s2 + $0x2f0] sm:$0xff]
    %v213 = vld [vmem:[%s2 + $0x2f8] sm:$0xff]
    %v214 = vld [vmem:[%s2 + $0x300] sm:$0xff]
    %v215 = vld [vmem:[%s2 + $0x308] sm:$0xff]
    %v216 = vld [vmem:[%s2 + $0x310] sm:$0xff]
    %v217 = vld [vmem:[%s2 + $0x318] sm:$0xff]
    %v218 = vld [vmem:[%s2 + $0x320] sm:$0xff]
    %v219 = vld [vmem:[%s2 + $0x328] sm:$0xff]
    %v220 = vld [vmem:[%s2 + $0x330] sm:$0xff]
    %v221 = vld [vmem:[%s2 + $0x338] sm:$0xff]
    %v222 = vld [vmem:[%s2 + $0x340] sm:$0xff]
    %v223 = vld [vmem:[%s2 + $0x348] sm:$0xff]
    %v224 = vld [vmem:[%s2 + $0x350] sm:$0xff]
    %v225 = vld [vmem:[%s2 + $0x358] sm:$0xff]
    %v226 = vld [vmem:[%s2 + $0x360] sm:$0xff]
    %v227 = vld [vmem:[%s2 + $0x368] sm:$0xff]
    %v228 = vld [vmem:[%s2 + $0x370] sm:$0xff]
    %v229 = vld [vmem:[%s2 + $0x378] sm:$0xff]
    %v230 = vld [vmem:[%s2 + $0x380] sm:$0xff]
    %v231 = vld [vmem:[%s2 + $0x388] sm:$0xff]
    %v232 = vld [vmem:[%s2 + $0x390] sm:$0xff]
    %v233 = vld [vmem:[%s2 + $0x398] sm:$0xff]
    %v234 = vld [vmem:[%s2 + $0x3a0] sm:$0xff]
    %v235 = vld [vmem:[%s2 + $0x3a8] sm:$0xff]
    %v236 = vld [vmem:[%s2 + $0x3b0] sm:$0xff]
    %v237 = vld [vmem:[%s2 + $0x3b8] sm:$0xff]
    %v238 = vld [vmem:[%s2 + $0x3c0] sm:$0xff]
    %v239 = vld [vmem:[%s2 + $0x3c8] sm:$0xff]
    %v240 = vld [vmem:[%s2 + $0x3d0] sm:$0xff]
    %v241 = vld [vmem:[%s2 + $0x3d8] sm:$0xff]
    %v242 = vld [vmem:[%s2 + $0x3e0] sm:$0xff]
    %v243 = vld [vmem:[%s2 + $0x3e8] sm:$0xff]
    %v244 = vld [vmem:[%s2 + $0x3f0] sm:$0xff]
    %v245 = vld [vmem:[%s2 + $0x3f8] sm:$0xff]
    %246 = vmatpush.msra.mxu0 %v133
    %247 = vmatpush.msra.mxu0 %v132
    %248 = vmatpush.msra.mxu0 %v131
    %249 = vmatpush.msra.mxu0 %v130
    %250 = vmatpush.msra.mxu0 %v129
    %251 = vmatpush.msra.mxu0 %v128
    %252 = vmatpush.msra.mxu0 %v127
    %253 = vmatpush.msra.mxu0 %v126
    %254 = vmatpush.msra.mxu0 %v125
    %255 = vmatpush.msra.mxu0 %v124
    %256 = vmatpush.msra.mxu0 %v123
    %257 = vmatpush.msra.mxu0 %v122
    %258 = vmatpush.msra.mxu0 %v121
    %259 = vmatpush.msra.mxu0 %v120
    %260 = vmatpush.msra.mxu0 %v119
    %261 = vmatpush.msra.mxu0 %v118
    %262 = vmatmul.f32.gmra.mxu0 %v32
    %v263 = vpop.f32.mrf.mxu0
    %v264 = vadd.f32 0.0, %v263
    %265 = vmatmul.f32.gmra.mxu0 %v33
    %v266 = vpop.f32.mrf.mxu0
    %v267 = vadd.f32 0.0, %v266
    %268 = vdwg.mxu0
    %269 = vmatpush.msra.mxu0 %v149
    %270 = vmatpush.msra.mxu0 %v148
    %271 = vmatpush.msra.mxu0 %v147
    %272 = vmatpush.msra.mxu0 %v146
    %273 = vmatpush.msra.mxu0 %v145
    %274 = vmatpush.msra.mxu0 %v144
    %275 = vmatpush.msra.mxu0 %v143
    %276 = vmatpush.msra.mxu0 %v142
    %277 = vmatpush.msra.mxu0 %v141
    %278 = vmatpush.msra.mxu0 %v140
    %279 = vmatpush.msra.mxu0 %v139
    %280 = vmatpush.msra.mxu0 %v138
    %281 = vmatpush.msra.mxu0 %v137
    %282 = vmatpush.msra.mxu0 %v136
    %283 = vmatpush.msra.mxu0 %v135
    %284 = vmatpush.msra.mxu0 %v134
    %285 = vmatmul.f32.gmra.mxu0 %v44
    %v286 = vpop.f32.mrf.mxu0
    %v287 = vadd.f32 %v264, %v286
    %288 = vmatmul.f32.gmra.mxu0 %v45
    %v289 = vpop.f32.mrf.mxu0
    %v290 = vadd.f32 %v267, %v289
    %291 = vdwg.mxu0
    %292 = vmatpush.msra.mxu0 %v165
    %293 = vmatpush.msra.mxu0 %v164
    %294 = vmatpush.msra.mxu0 %v163
    %295 = vmatpush.msra.mxu0 %v162
    %296 = vmatpush.msra.mxu0 %v161
    %297 = vmatpush.msra.mxu0 %v160
    %298 = vmatpush.msra.mxu0 %v159
    %299 = vmatpush.msra.mxu0 %v158
    %300 = vmatpush.msra.mxu0 %v157
    %301 = vmatpush.msra.mxu0 %v156
    %302 = vmatpush.msra.mxu0 %v155
    %303 = vmatpush.msra.mxu0 %v154
    %304 = vmatpush.msra.mxu0 %v153
    %305 = vmatpush.msra.mxu0 %v152
    %306 = vmatpush.msra.mxu0 %v151
    %307 = vmatpush.msra.mxu0 %v150
    %308 = vmatmul.f32.gmra.mxu0 %v56
    %v309 = vpop.f32.mrf.mxu0
    %v310 = vadd.f32 %v287, %v309
    %311 = vmatmul.f32.gmra.mxu0 %v57
    %v312 = vpop.f32.mrf.mxu0
    %v313 = vadd.f32 %v290, %v312
    %314 = vdwg.mxu0
    %315 = vmatpush.msra.mxu0 %v181
    %316 = vmatpush.msra.mxu0 %v180
    %317 = vmatpush.msra.mxu0 %v179
    %318 = vmatpush.msra.mxu0 %v178
    %319 = vmatpush.msra.mxu0 %v177
    %320 = vmatpush.msra.mxu0 %v176
    %321 = vmatpush.msra.mxu0 %v175
    %322 = vmatpush.msra.mxu0 %v174
    %323 = vmatpush.msra.mxu0 %v173
    %324 = vmatpush.msra.mxu0 %v172
    %325 = vmatpush.msra.mxu0 %v171
    %326 = vmatpush.msra.mxu0 %v170
    %327 = vmatpush.msra.mxu0 %v169
    %328 = vmatpush.msra.mxu0 %v168
    %329 = vmatpush.msra.mxu0 %v167
    %330 = vmatpush.msra.mxu0 %v166
    %331 = vmatmul.f32.gmra.mxu0 %v68
    %v332 = vpop.f32.mrf.mxu0
    %v333 = vadd.f32 %v310, %v332
    %334 = vmatmul.f32.gmra.mxu0 %v69
    %v335 = vpop.f32.mrf.mxu0
    %v336 = vadd.f32 %v313, %v335
    %337 = vdwg.mxu0
    %338 = vmatpush.msra.mxu0 %v197
    %339 = vmatpush.msra.mxu0 %v196
    %340 = vmatpush.msra.mxu0 %v195
    %341 = vmatpush.msra.mxu0 %v194
    %342 = vmatpush.msra.mxu0 %v193
    %343 = vmatpush.msra.mxu0 %v192
    %344 = vmatpush.msra.mxu0 %v191
    %345 = vmatpush.msra.mxu0 %v190
    %346 = vmatpush.msra.mxu0 %v189
    %347 = vmatpush.msra.mxu0 %v188
    %348 = vmatpush.msra.mxu0 %v187
    %349 = vmatpush.msra.mxu0 %v186
    %350 = vmatpush.msra.mxu0 %v185
    %351 = vmatpush.msra.mxu0 %v184
    %352 = vmatpush.msra.mxu0 %v183
    %353 = vmatpush.msra.mxu0 %v182
    %354 = vmatmul.f32.gmra.mxu0 %v80
    %v355 = vpop.f32.mrf.mxu0
    %v356 = vadd.f32 %v333, %v355
    %357 = vmatmul.f32.gmra.mxu0 %v81
    %v358 = vpop.f32.mrf.mxu0
    %v359 = vadd.f32 %v336, %v358
    %360 = vdwg.mxu0
    %361 = vmatpush.msra.mxu0 %v213
    %362 = vmatpush.msra.mxu0 %v212
    %363 = vmatpush.msra.mxu0 %v211
    %364 = vmatpush.msra.mxu0 %v210
    %365 = vmatpush.msra.mxu0 %v209
    %366 = vmatpush.msra.mxu0 %v208
    %367 = vmatpush.msra.mxu0 %v207
    %368 = vmatpush.msra.mxu0 %v206
    %369 = vmatpush.msra.mxu0 %v205
    %370 = vmatpush.msra.mxu0 %v204
    %371 = vmatpush.msra.mxu0 %v203
    %372 = vmatpush.msra.mxu0 %v202
    %373 = vmatpush.msra.mxu0 %v201
    %374 = vmatpush.msra.mxu0 %v200
    %375 = vmatpush.msra.mxu0 %v199
    %376 = vmatpush.msra.mxu0 %v198
    %377 = vmatmul.f32.gmra.mxu0 %v92
    %v378 = vpop.f32.mrf.mxu0
    %v379 = vadd.f32 %v356, %v378
    %380 = vmatmul.f32.gmra.mxu0 %v93
    %v381 = vpop.f32.mrf.mxu0
    %v382 = vadd.f32 %v359, %v381
    %383 = vdwg.mxu0
    %384 = vmatpush.msra.mxu0 %v229
    %385 = vmatpush.msra.mxu0 %v228
    %386 = vmatpush.msra.mxu0 %v227
    %387 = vmatpush.msra.mxu0 %v226
    %388 = vmatpush.msra.mxu0 %v225
    %389 = vmatpush.msra.mxu0 %v224
    %390 = vmatpush.msra.mxu0 %v223
    %391 = vmatpush.msra.mxu0 %v222
    %392 = vmatpush.msra.mxu0 %v221
    %393 = vmatpush.msra.mxu0 %v220
    %394 = vmatpush.msra.mxu0 %v219
    %395 = vmatpush.msra.mxu0 %v218
    %396 = vmatpush.msra.mxu0 %v217
    %397 = vmatpush.msra.mxu0 %v216
    %398 = vmatpush.msra.mxu0 %v215
    %399 = vmatpush.msra.mxu0 %v214
    %400 = vmatmul.f32.gmra.mxu0 %v104
    %v401 = vpop.f32.mrf.mxu0
    %v402 = vadd.f32 %v379, %v401
    %403 = vmatmul.f32.gmra.mxu0 %v105
    %v404 = vpop.f32.mrf.mxu0
    %v405 = vadd.f32 %v382, %v404
    %406 = vdwg.mxu0
    %407 = vmatpush.msra.mxu0 %v245
    %408 = vmatpush.msra.mxu0 %v244
    %409 = vmatpush.msra.mxu0 %v243
    %410 = vmatpush.msra.mxu0 %v242
    %411 = vmatpush.msra.mxu0 %v241
    %412 = vmatpush.msra.mxu0 %v240
    %413 = vmatpush.msra.mxu0 %v239
    %414 = vmatpush.msra.mxu0 %v238
    %415 = vmatpush.msra.mxu0 %v237
    %416 = vmatpush.msra.mxu0 %v236
    %417 = vmatpush.msra.mxu0 %v235
    %418 = vmatpush.msra.mxu0 %v234
    %419 = vmatpush.msra.mxu0 %v233
    %420 = vmatpush.msra.mxu0 %v232
    %421 = vmatpush.msra.mxu0 %v231
    %422 = vmatpush.msra.mxu0 %v230
    %423 = vmatmul.f32.gmra.mxu0 %v116
    %v424 = vpop.f32.mrf.mxu0
    %v425 = vadd.f32 %v402, %v424
    %426 = vmatmul.f32.gmra.mxu0 %v117
    %v427 = vpop.f32.mrf.mxu0
    %v428 = vadd.f32 %v405, %v427
    %429 = vdwg.mxu0
    %v430 = vmax.f32 %v425, 0.0
    %v431 = vmax.f32 %v428, 0.0
    %434 = vrot.lane.b32.xlu0 %v430, 96
    %v435 = vpop.permute.xlu0 %434
    %436 = vrot.lane.b32.xlu0 %v431, 96
    %v437 = vpop.permute.xlu0 %436
    %v440 = vmax.f32 %v430, %v435
    %v441 = vmax.f32 %v431, %v437
    %v442 = vld [vmem:[%s3] sm:$0xff]
    %v443 = vld [vmem:[%s3 + $0x8] sm:$0xff]
    %v444 = vld [vmem:[%s3 + $0x10] sm:$0xff]
    %v445 = vld [vmem:[%s3 + $0x18] sm:$0xff]
    %v446 = vld [vmem:[%s3 + $0x20] sm:$0x1]
    %v447 = vperm.slane %v446, 0
    %vm448 = vcmask 261120
    %v450 = vsel %vm448, %v440, 0
    %452 = vmatpush.msra.mxu0 0.0
    %453 = vmatpush.msra.mxu0 0.0
    %454 = vmatpush.msra.mxu0 0.0
    %455 = vmatpush.msra.mxu0 0.0
    %456 = vmatpush.msra.mxu0 0.0
    %457 = vmatpush.msra.mxu0 0.0
    %458 = vmatpush.msra.mxu0 0.0
    %459 = vmatpush.msra.mxu0 0.0
    %460 = vmatpush.msra.mxu0 0.0
    %461 = vmatpush.msra.mxu0 0.0
    %462 = vmatpush.msra.mxu0 0.0
    %463 = vmatpush.msra.mxu0 0.0
    %464 = vmatpush.msra.mxu0 %v445
    %465 = vmatpush.msra.mxu0 %v444
    %466 = vmatpush.msra.mxu0 %v443
    %467 = vmatpush.msra.mxu0 %v442
    %468 = vmatmul.f32.gmra.mxu0 %v450
    %v469 = vpop.f32.mrf.mxu0
    %v470 = vadd.f32 %v447, %v469
    %471 = vdwg.mxu0
    %vm472 = vcmask 277504
    %473 = vst.msk [vmem:[#allocation2] sm:$0xff] %vm472, %v470
    %475 = vrot.lane.b32.xlu0 %v441, 64
    %v476 = vpop.permute.xlu0 %475
    %vm478 = vcmask 785920
    %479 = vst.msk [vmem:[#allocation2] sm:$0xff] %vm478, %v476
    // Predicated region
    $region18: #{tpu_custom_call.1} parent=1 // pred_check
      _
    $region19: #{tpu_custom_call.1} parent=1 // pred_check_branch
      %481 = sbr.rel (0) target = $region21
    $region20: #{tpu_custom_call.1} parent=1 // pred_region
      %483 = vsyncadd [#allocation3], 0
      %s485 = sshll.u32 [#allocation2], 4
      %s486 = int_to_ptr.vmem [resolvable:$true] %s485
      %s487 = sshll.u32 %s4, 4
      %s488 = int_to_ptr.hbm [resolvable:$true] %s487
      %490 = dma.vmem_to_hbm [thread:$0]  %s486, 128, %s488, [#allocation3]
    $region21: #{tpu_custom_call.1} parent=1 // pred_fallthru
      _
    // Predicated region
    $region22: #{tpu_custom_call.1} parent=1 // pred_check
      _
    $region23: #{tpu_custom_call.1} parent=1 // pred_check_branch
      %492 = sbr.rel (0) target = $region25
    $region24: #{tpu_custom_call.1} parent=1 // pred_region
      %494 = dma.done [#allocation3], 128
    $region25: #{tpu_custom_call.1} parent=1 // pred_fallthru
      _
    %495 = vsyncpa [#allocation3], 1

</llo_original>
